<compile_context>
chip_gen: v6e
topology: v6e:2x2x1
jax: 0.10.0
libtpu: 0.0.40
codegen_flags: <defaults>
</compile_context>

<pallas_src>
import functools

import jax
import jax.numpy as jnp
from jax.experimental import pallas as pl
from jax.experimental.pallas import tpu as pltpu

_SMOOTH = 1e-6
_LANES = 128
_SUBLANES = 8
_SLAB_ROWS = 1024          # inner-loop slab: (1024, 128) f32 temps = 512 KiB
_MAX_TILE_ROWS = 8192      # (8192, 128) f32 input block = 4 MiB
_PAD_PRED = -100.0         # sigmoid(-100) == 0 exactly in f32 (tanh(-50) == -1)


def _round_up(x, m):
    return ((x + m - 1) // m) * m


def _dice_partial_kernel(pred_ref, target_ref, part_ref, *,
                         tile_rows, slab, rows_valid, needs_mask):
    """Per-tile partial sums folded to (8,128) slabs:
       part[0]=sum(sigmoid(p)*t), part[1]=sum(sigmoid(p)), part[2]=sum(t)."""
    n_slabs = tile_rows // slab
    zero = jnp.zeros((_SUBLANES, _LANES), jnp.float32)

    def accumulate(valid_rows):
        # valid_rows is None for fully-valid tiles (hot path, no masking) or a
        # dynamic scalar row count for the single ragged last tile.
        def body(s, carry):
            inter_acc, p_acc, t_acc = carry
            r0 = pl.multiple_of(s * slab, slab)
            x = pred_ref[pl.ds(r0, slab), :].astype(jnp.float32)
            t = target_ref[pl.ds(r0, slab), :].astype(jnp.float32)
            # sigmoid(x) = 0.5*(tanh(x/2)+1): one EUP transcendental per element.
            p = 0.5 * (jnp.tanh(0.5 * x) + 1.0)
            if valid_rows is not None:
                row = r0 + jax.lax.broadcasted_iota(jnp.int32, (slab, _LANES), 0)
                keep = row < valid_rows          # row-granular: no int32 overflow
                p = jnp.where(keep, p, 0.0)
                t = jnp.where(keep, t, 0.0)
            # (slab,128) -> (slab//8, 8, 128): matches (8,128) tiling -> free
            # reshape; the axis-0 sums are pure vreg adds on the VPU.
            pr = p.reshape(slab // _SUBLANES, _SUBLANES, _LANES)
            tr = t.reshape(slab // _SUBLANES, _SUBLANES, _LANES)
            inter_acc = inter_acc + jnp.sum(pr * tr, axis=0)
            p_acc = p_acc + jnp.sum(pr, axis=0)
            t_acc = t_acc + jnp.sum(tr, axis=0)
            return inter_acc, p_acc, t_acc

        return jax.lax.fori_loop(0, n_slabs, body, (zero, zero, zero),
                                 unroll=(n_slabs <= 8))

    def write(vals):
        inter_acc, p_acc, t_acc = vals
        part_ref[0, 0] = inter_acc
        part_ref[0, 1] = p_acc
        part_ref[0, 2] = t_acc

    if not needs_mask:
        write(accumulate(None))
    else:
        i = pl.program_id(0)
        is_last = i == pl.num_programs(0) - 1

        @pl.when(jnp.logical_not(is_last))
        def _():
            write(accumulate(None))

        @pl.when(is_last)
        def _():
            write(accumulate(rows_valid - i * tile_rows))


def dice_loss(pred, target, smooth=_SMOOTH):
    """Pallas TPU implementation of DiceLoss.forward(pred, target)."""
    assert pred.shape == target.shape, "pred and target must have the same shape"

    pred_flat = jnp.reshape(pred, (-1,))
    target_flat = jnp.reshape(target, (-1,))
    n = pred_flat.shape[0]

    # Pad (cheaply, and only when needed) to an (8,128) chunk.  The pad values
    # contribute exactly zero to all three sums, so no per-element mask is
    # needed for the pad region.
    rows_valid = _round_up(pl.cdiv(n, _LANES), _SUBLANES)
    n_pad = rows_valid * _LANES - n
    if n_pad:
        pred_flat = jnp.pad(pred_flat, (0, n_pad), constant_values=_PAD_PRED)
        target_flat = jnp.pad(target_flat, (0, n_pad), constant_values=0.0)

    # Tile/slab selection: big tiles (multiple of the slab) for large inputs,
    # a single full-extent tile for small ones.
    if rows_valid < _SLAB_ROWS:
        slab = tile_rows = rows_valid
    else:
        slab = _SLAB_ROWS
        tile_rows = min(_MAX_TILE_ROWS, (rows_valid // _SLAB_ROWS) * _SLAB_ROWS)
    num_tiles = pl.cdiv(rows_valid, tile_rows)
    needs_mask = (rows_valid % tile_rows) != 0   # only the last tile is ragged

    pred2d = pred_flat.reshape(rows_valid, _LANES)
    target2d = target_flat.reshape(rows_valid, _LANES)

    kernel = functools.partial(
        _dice_partial_kernel,
        tile_rows=int(tile_rows), slab=int(slab),
        rows_valid=int(rows_valid), needs_mask=bool(needs_mask))

    parts = pl.pallas_call(
        kernel,
        out_shape=jax.ShapeDtypeStruct((num_tiles, 3, _SUBLANES, _LANES),
                                       jnp.float32),
        grid_spec=pltpu.PrefetchScalarGridSpec(
            num_scalar_prefetch=0,
            grid=(num_tiles,),
            in_specs=[
                pl.BlockSpec((tile_rows, _LANES), lambda i: (i, 0)),
                pl.BlockSpec((tile_rows, _LANES), lambda i: (i, 0)),
            ],
            out_specs=pl.BlockSpec((1, 3, _SUBLANES, _LANES),
                                   lambda i: (i, 0, 0, 0)),
        ),
        compiler_params=pltpu.CompilerParams(
            dimension_semantics=("parallel",),
            # ~19 MiB actually used; explicit limit covers v5e's 16 MiB scoped
            # default and stays well under v7x's 64 MiB physical VMEM.
            vmem_limit_bytes=48 * 1024 * 1024),
    )(pred2d, target2d)

    # Tiny epilogue over the (num_tiles, 3, 8, 128) partials.
    intersection = jnp.sum(parts[:, 0])
    pred_sum = jnp.sum(parts[:, 1])
    target_sum = jnp.sum(parts[:, 2])
    dice_score = (2.0 * intersection + smooth) / (pred_sum + target_sum + smooth)
    return 1.0 - dice_score


def dice_loss_ref(pred, target, smooth=_SMOOTH):
    """Pure-JAX reference matching the PyTorch module."""
    p = jax.nn.sigmoid(pred.astype(jnp.float32)).reshape(-1)
    t = target.astype(jnp.float32).reshape(-1)
    inter = jnp.sum(p * t)
    dice = (2.0 * inter + smooth) / (jnp.sum(p) + jnp.sum(t) + smooth)
    return 1.0 - dice


if __name__ == "__main__":
    key = jax.random.PRNGKey(0)
    k1, k2 = jax.random.split(key)

    # small UNet-style logits / binary mask: NCHW = (2, 4, 16, 16)
    pred = jax.random.normal(k1, (2, 4, 16, 16), dtype=jnp.float32)
    target = (jax.random.uniform(k2, (2, 4, 16, 16)) > 0.5).astype(jnp.float32)

    loss = dice_loss(pred, target)
    loss = jax.block_until_ready(loss)

    ref = dice_loss_ref(pred, target)
    assert jnp.allclose(loss, ref, atol=1e-5, rtol=1e-5), (loss, ref)

    print("KERNEL_OK")
</pallas_src>

<mosaic_0001>
module attributes {stable_mosaic.version = 11 : i64} {
  func.func @_dice_partial_kernel(%arg0: i32, %arg1: memref<16x128xf32, #tpu.memory_space<vmem>>, %arg2: memref<16x128xf32, #tpu.memory_space<vmem>>, %arg3: memref<1x3x8x128xf32, #tpu.memory_space<vmem>>) attributes {dimension_semantics = [#tpu.dimension_semantics<parallel>], iteration_bounds = array<i64: 1>, scalar_prefetch = 0 : i64, scratch_operands = 0 : i64, tpu.core_type = #tpu.core_type<tc>, window_params = [{transform_indices = @transform_0, window_bounds = array<i64: 16, 128>}, {transform_indices = @transform_1, window_bounds = array<i64: 16, 128>}, {transform_indices = @transform_2, window_bounds = array<i64: 1, 3, 8, 128>}]} {
    %cst = arith.constant 0.000000e+00 : f32
    %0 = vector.broadcast %cst : f32 to vector<8x128xf32>
    %c0_i32 = arith.constant 0 : i32
    %c16_i32 = arith.constant 16 : i32
    %1 = arith.muli %c0_i32, %c16_i32 : i32
    %2 = tpu.assume_multiple %1, 16 : i32
    %3 = arith.index_cast %2 : i32 to index
    %c0 = arith.constant 0 : index
    %4 = vector.load %arg1[%3, %c0] : memref<16x128xf32, #tpu.memory_space<vmem>>, vector<16x128xf32>
    %5 = arith.index_cast %2 : i32 to index
    %c0_0 = arith.constant 0 : index
    %6 = vector.load %arg2[%5, %c0_0] : memref<16x128xf32, #tpu.memory_space<vmem>>, vector<16x128xf32>
    %cst_1 = arith.constant 5.000000e-01 : f32
    %7 = vector.broadcast %cst_1 : f32 to vector<16x128xf32>
    %8 = arith.mulf %7, %4 : vector<16x128xf32>
    %9 = math.tanh %8 : vector<16x128xf32>
    %cst_2 = arith.constant 1.000000e+00 : f32
    %10 = vector.broadcast %cst_2 : f32 to vector<16x128xf32>
    %11 = arith.addf %9, %10 : vector<16x128xf32>
    %cst_3 = arith.constant 5.000000e-01 : f32
    %12 = vector.broadcast %cst_3 : f32 to vector<16x128xf32>
    %13 = arith.mulf %12, %11 : vector<16x128xf32>
    %14 = vector.shape_cast %13 : vector<16x128xf32> to vector<2x8x128xf32>
    %15 = vector.shape_cast %6 : vector<16x128xf32> to vector<2x8x128xf32>
    %16 = arith.mulf %14, %15 : vector<2x8x128xf32>
    %cst_4 = arith.constant dense<0.000000e+00> : vector<8x128xf32>
    %17 = vector.multi_reduction <add>, %16, %cst_4 [0] : vector<2x8x128xf32> to vector<8x128xf32>
    %18 = arith.addf %0, %17 : vector<8x128xf32>
    %cst_5 = arith.constant dense<0.000000e+00> : vector<8x128xf32>
    %19 = vector.multi_reduction <add>, %14, %cst_5 [0] : vector<2x8x128xf32> to vector<8x128xf32>
    %20 = arith.addf %0, %19 : vector<8x128xf32>
    %cst_6 = arith.constant dense<0.000000e+00> : vector<8x128xf32>
    %21 = vector.multi_reduction <add>, %15, %cst_6 [0] : vector<2x8x128xf32> to vector<8x128xf32>
    %22 = arith.addf %0, %21 : vector<8x128xf32>
    %c1_i32 = arith.constant 1 : i32
    %c0_7 = arith.constant 0 : index
    %c0_8 = arith.constant 0 : index
    %c0_9 = arith.constant 0 : index
    %c0_10 = arith.constant 0 : index
    %23 = vector.load %arg3[%c0_7, %c0_8, %c0_9, %c0_10] : memref<1x3x8x128xf32, #tpu.memory_space<vmem>>, vector<1x1x8x128xf32>
    %24 = vector.shape_cast %23 : vector<1x1x8x128xf32> to vector<8x128xf32>
    %25 = vector.shape_cast %18 : vector<8x128xf32> to vector<1x1x8x128xf32>
    tpu.vector_store %arg3[%c0_7, %c0_8, %c0_9, %c0_10], %25 {strides = array<i32>} : memref<1x3x8x128xf32, #tpu.memory_space<vmem>>, vector<1x1x8x128xf32>,
    %c0_11 = arith.constant 0 : index
    %c1 = arith.constant 1 : index
    %c0_12 = arith.constant 0 : index
    %c0_13 = arith.constant 0 : index
    %26 = vector.load %arg3[%c0_11, %c1, %c0_12, %c0_13] : memref<1x3x8x128xf32, #tpu.memory_space<vmem>>, vector<1x1x8x128xf32>
    %27 = vector.shape_cast %26 : vector<1x1x8x128xf32> to vector<8x128xf32>
    %28 = vector.shape_cast %20 : vector<8x128xf32> to vector<1x1x8x128xf32>
    tpu.vector_store %arg3[%c0_11, %c1, %c0_12, %c0_13], %28 {strides = array<i32>} : memref<1x3x8x128xf32, #tpu.memory_space<vmem>>, vector<1x1x8x128xf32>,
    %c0_14 = arith.constant 0 : index
    %c2 = arith.constant 2 : index
    %c0_15 = arith.constant 0 : index
    %c0_16 = arith.constant 0 : index
    %29 = vector.load %arg3[%c0_14, %c2, %c0_15, %c0_16] : memref<1x3x8x128xf32, #tpu.memory_space<vmem>>, vector<1x1x8x128xf32>
    %30 = vector.shape_cast %29 : vector<1x1x8x128xf32> to vector<8x128xf32>
    %31 = vector.shape_cast %22 : vector<8x128xf32> to vector<1x1x8x128xf32>
    tpu.vector_store %arg3[%c0_14, %c2, %c0_15, %c0_16], %31 {strides = array<i32>} : memref<1x3x8x128xf32, #tpu.memory_space<vmem>>, vector<1x1x8x128xf32>,
    return
  }
  func.func @transform_0(%arg0: i32) -> (i32, i32) {
    %c0_i32 = arith.constant 0 : i32
    %c0_i32_0 = arith.constant 0 : i32
    return %arg0, %c0_i32 : i32, i32
  }
  func.func @transform_1(%arg0: i32) -> (i32, i32) {
    %c0_i32 = arith.constant 0 : i32
    %c0_i32_0 = arith.constant 0 : i32
    return %arg0, %c0_i32 : i32, i32
  }
  func.func @transform_2(%arg0: i32) -> (i32, i32, i32, i32) {
    %c0_i32 = arith.constant 0 : i32
    %c0_i32_0 = arith.constant 0 : i32
    %c0_i32_1 = arith.constant 0 : i32
    %c0_i32_2 = arith.constant 0 : i32
    return %arg0, %c0_i32, %c0_i32_0, %c0_i32_1 : i32, i32, i32, i32
  }
}

</mosaic_0001>

<llo_original>
// kernel: tpu_custom_call.1
$region0: #{tpu_custom_call.1}
  #allocation0 [shape = 'u32[]', space=smem, size = 0x4, offset = 0x4, fixed_abs, tag = 'smem constant byte address 0x4 - core index']
  #allocation1 [shape = 'u32[144,128]{1,0:T(1,128)}', space=vmem, size = 0x12000, scoped, tag = 'internal scratch']
  %s0 = inlined_call_operand.hbm [shape: f32[16,128], index: 0, kind: input, shape index: {}]
  %s1 = inlined_call_operand.hbm [shape: f32[16,128], index: 1, kind: input, shape index: {}]
  %s2 = inlined_call_operand.hbm [shape: f32[1,3,8,128], index: 2, kind: output, shape index: {}]
  %s3 = sld [smem:[#allocation0]]
  $region26: #{tpu_custom_call.1} parent=0
    _
  %s5 = ssub.s32 1, %s3
  %s6 = scalar_select 0, %s5, %s3
  $region1: #{tpu_custom_call.1} parent=0
    #allocation2 [shape = 'u8[8192]{0}', space=vmem, size = 0x2000, scoped, tag = 'input window, operand 0, single buffered']
    #allocation3 [shape = 's32[1]{0}', space=sflag, size = 0x4, scoped, tag = 'scoped memory for tpu_custom_call.1']
    #allocation4 [shape = 's32[1]{0}', space=sflag, size = 0x4, scoped, tag = 'scoped memory for tpu_custom_call.1']
    #allocation5 [shape = 'u8[8192]{0}', space=vmem, size = 0x2000, scoped, tag = 'input window, operand 1, single buffered']
    #allocation6 [shape = 's32[1]{0}', space=sflag, size = 0x4, scoped, tag = 'scoped memory for tpu_custom_call.1']
    #allocation7 [shape = 'u8[12288]{0}', space=vmem, size = 0x3000, scoped, tag = 'output window, operand 0, single buffered']
    %7 = vsyncpa [#allocation3], 0
    %8 = vsyncpa [#allocation6], 0
    %9 = vsyncpa [#allocation4], 0
    // Predicated region
    $region2: #{tpu_custom_call.1} parent=1 // pred_check
      _
    $region3: #{tpu_custom_call.1} parent=1 // pred_check_branch
      %11 = sbr.rel (0) target = $region5
    $region4: #{tpu_custom_call.1} parent=1 // pred_region
      %s13 = ssub.s32 256, 256
      %14 = vsyncadd [#allocation3], %s13
      %s15 = sshll.u32 [#allocation2], 4
      %s16 = int_to_ptr.vmem [resolvable:$true] %s15
      %21 = dma.hbm_to_vmem [thread:$0]  %s0, 256, %s16, [#allocation3], 128, 128, 8
    $region5: #{tpu_custom_call.1} parent=1 // pred_fallthru
      _
    // Predicated region
    $region6: #{tpu_custom_call.1} parent=1 // pred_check
      _
    $region7: #{tpu_custom_call.1} parent=1 // pred_check_branch
      %23 = sbr.rel (0) target = $region9
    $region8: #{tpu_custom_call.1} parent=1 // pred_region
      %s25 = ssub.s32 256, 256
      %26 = vsyncadd [#allocation6], %s25
      %s27 = sshll.u32 [#allocation5], 4
      %s28 = int_to_ptr.vmem [resolvable:$true] %s27
      %33 = dma.hbm_to_vmem [thread:$0]  %s1, 256, %s28, [#allocation6], 128, 128, 8
    $region9: #{tpu_custom_call.1} parent=1 // pred_fallthru
      _
    // Predicated region
    $region10: #{tpu_custom_call.1} parent=1 // pred_check
      _
    $region11: #{tpu_custom_call.1} parent=1 // pred_check_branch
      %35 = sbr.rel (0) target = $region13
    $region12: #{tpu_custom_call.1} parent=1 // pred_region
      %36 = dma.done [#allocation3], 256
    $region13: #{tpu_custom_call.1} parent=1 // pred_fallthru
      _
    // Predicated region
    $region14: #{tpu_custom_call.1} parent=1 // pred_check
      _
    $region15: #{tpu_custom_call.1} parent=1 // pred_check_branch
      %38 = sbr.rel (0) target = $region17
    $region16: #{tpu_custom_call.1} parent=1 // pred_region
      %39 = dma.done [#allocation6], 256
    $region17: #{tpu_custom_call.1} parent=1 // pred_fallthru
      _
    %v40 = vld [vmem:[#allocation2] sm:$0xff]
    %v41 = vld [vmem:[#allocation2 + $0x8] sm:$0xff]
    %v42 = vld [vmem:[#allocation5] sm:$0xff]
    %v43 = vld [vmem:[#allocation5 + $0x8] sm:$0xff]
    %v44 = vmul.f32 %v40, 0.5
    %v45 = vmul.f32 %v41, 0.5
    %v46 = vtanh.pop %v44
    %v47 = vtanh.pop %v45
    %v48 = vadd.f32 %v46, 1.0
    %v49 = vadd.f32 %v47, 1.0
    %v50 = vmul.f32 %v48, 0.5
    %v51 = vmul.f32 %v49, 0.5
    %v52 = vmul.f32 %v50, %v42
    %v53 = vmul.f32 %v51, %v43
    %v54 = vadd.f32 %v52, %v53
    %v55 = vadd.f32 %v54, 0.0
    %v56 = vadd.f32 %v50, %v51
    %v57 = vadd.f32 %v56, 0.0
    %v58 = vadd.f32 %v42, %v43
    %v59 = vadd.f32 %v58, 0.0
    %60 = vst [vmem:[#allocation7] sm:$0xff] %v55
    %s61 = scalar_lea.vmem [#allocation7], 8
    %62 = vst [vmem:[%s61] sm:$0xff] %v57
    %s63 = scalar_lea.vmem [#allocation7], 16
    %64 = vst [vmem:[%s63] sm:$0xff] %v59
    // Predicated region
    $region18: #{tpu_custom_call.1} parent=1 // pred_check
      _
    $region19: #{tpu_custom_call.1} parent=1 // pred_check_branch
      %66 = sbr.rel (0) target = $region21
    $region20: #{tpu_custom_call.1} parent=1 // pred_region
      %s68 = ssub.s32 384, 384
      %69 = vsyncadd [#allocation4], %s68
      %s70 = sshll.u32 [#allocation7], 4
      %s71 = int_to_ptr.vmem [resolvable:$true] %s70
      %76 = dma.vmem_to_hbm [thread:$0]  %s71, 384, %s2, [#allocation4], 128, 128, 8
    $region21: #{tpu_custom_call.1} parent=1 // pred_fallthru
      _
    // Predicated region
    $region22: #{tpu_custom_call.1} parent=1 // pred_check
      _
    $region23: #{tpu_custom_call.1} parent=1 // pred_check_branch
      %78 = sbr.rel (0) target = $region25
    $region24: #{tpu_custom_call.1} parent=1 // pred_region
      %79 = dma.done [#allocation4], 384
    $region25: #{tpu_custom_call.1} parent=1 // pred_fallthru
      _
    %80 = vsyncpa [#allocation3], 1
    %81 = vsyncpa [#allocation6], 1
    %82 = vsyncpa [#allocation4], 1

</llo_original>
